<compile_context>
chip_gen: v6e
topology: v6e:2x2x1
jax: 0.10.0
libtpu: 0.0.40
codegen_flags: <defaults>
</compile_context>

<pallas_src>
import jax
import jax.numpy as jnp
from jax.experimental import pallas as pl
from jax.experimental.pallas import tpu as pltpu


def _round_up(n, m):
    return (n + m - 1) // m * m


def ann_kernel(x_ref,
               w1_ref, b1_ref,
               w2_ref, b2_ref,
               w3_ref, b3_ref,
               w4_ref, b4_ref,
               out_ref):
    # bf16 operands for the MXU; f32 accumulation; bias-add / ReLU in f32.
    x = x_ref[...].astype(jnp.bfloat16)

    # Layer 1: Linear(in, 200) + ReLU   (padded to d0 x 256)
    h = jnp.dot(x, w1_ref[...], preferred_element_type=jnp.float32)
    h = jnp.maximum(h + b1_ref[...], 0.0).astype(jnp.bfloat16)

    # Layer 2: Linear(200, 100) + ReLU  (padded to 256 x 128)
    h = jnp.dot(h, w2_ref[...], preferred_element_type=jnp.float32)
    h = jnp.maximum(h + b2_ref[...], 0.0).astype(jnp.bfloat16)

    # Layer 3: Linear(100, 100) + ReLU  (padded to 128 x 128)
    h = jnp.dot(h, w3_ref[...], preferred_element_type=jnp.float32)
    h = jnp.maximum(h + b3_ref[...], 0.0).astype(jnp.bfloat16)

    # Layer 4: Linear(100, num_classes) -- logits (padded to 128 x 128)
    logits = jnp.dot(h, w4_ref[...], preferred_element_type=jnp.float32)
    out_ref[...] = logits + b4_ref[...]


def ann_forward(x, params, *, tm=1024):
    """Fused MLP forward. x: (B, in_features) f32. Returns (B, num_classes) f32."""
    (w1, b1), (w2, b2), (w3, b3), (w4, b4) = params
    B, in_features = x.shape
    num_classes = w4.shape[1]

    # Lane/MXU-aligned padded feature dims (zero padding is mathematically exact).
    d0 = _round_up(in_features, 128)
    d1 = _round_up(w1.shape[1], 128)   # 200 -> 256
    d2 = _round_up(w2.shape[1], 128)   # 100 -> 128
    d3 = _round_up(w3.shape[1], 128)   # 100 -> 128
    d4 = _round_up(num_classes, 128)   # lane-dense output stores

    def pad_w(w, rows, cols):
        w = jnp.pad(w, ((0, rows - w.shape[0]), (0, cols - w.shape[1])))
        return w.astype(jnp.bfloat16)

    def pad_b(b, cols):
        b = jnp.reshape(b, (1, -1)).astype(jnp.float32)
        return jnp.pad(b, ((0, 0), (0, cols - b.shape[1])))

    w1p, b1p = pad_w(w1, d0, d1), pad_b(b1, d1)
    w2p, b2p = pad_w(w2, d1, d2), pad_b(b2, d2)
    w3p, b3p = pad_w(w3, d2, d3), pad_b(b3, d3)
    w4p, b4p = pad_w(w4, d3, d4), pad_b(b4, d4)

    # Batch tile: big tiles amortize the ~0.35us per-grid-step overhead; tiny
    # per-row compute means VMEM is nowhere near the limit even at tm=1024.
    tm_eff = min(_round_up(tm, 8), _round_up(B, 8))
    b_pad = _round_up(B, tm_eff)
    xp = jnp.pad(x.astype(jnp.float32),
                 ((0, b_pad - B), (0, d0 - in_features)))

    grid = (b_pad // tm_eff,)

    def resident(a):
        # Weights / biases: same block every grid step -> stay VMEM-resident
        # (DMA'd once, never re-fetched).
        return pl.BlockSpec(a.shape, lambda i: (0,) * a.ndim)

    flops = 2 * b_pad * (d0 * d1 + d1 * d2 + d2 * d3 + d3 * d4)
    bytes_accessed = (xp.size * 4 + b_pad * d4 * 4
                      + sum(a.size * a.dtype.itemsize
                            for a in (w1p, b1p, w2p, b2p, w3p, b3p, w4p, b4p)))

    out = pl.pallas_call(
        ann_kernel,
        out_shape=jax.ShapeDtypeStruct((b_pad, d4), jnp.float32),
        grid=grid,
        in_specs=[pl.BlockSpec((tm_eff, d0), lambda i: (i, 0)),
                  resident(w1p), resident(b1p),
                  resident(w2p), resident(b2p),
                  resident(w3p), resident(b3p),
                  resident(w4p), resident(b4p)],
        out_specs=pl.BlockSpec((tm_eff, d4), lambda i: (i, 0)),
        compiler_params=pltpu.CompilerParams(
            dimension_semantics=("parallel",),
            vmem_limit_bytes=64 * 1024 * 1024),
        cost_estimate=pl.CostEstimate(flops=flops, transcendentals=0,
                                      bytes_accessed=bytes_accessed),
    )(xp, w1p, b1p, w2p, b2p, w3p, b3p, w4p, b4p)

    return out[:B, :num_classes]


def init_params(key, in_features, num_classes):
    """Deterministic init matching the PyTorch module's layer shapes.

    Weights are stored as (in, out) -- transposed vs. PyTorch's (out, in) --
    so the kernel computes y = x @ W + b directly.
    """
    dims = [(in_features, 200), (200, 100), (100, 100), (100, num_classes)]
    params = []
    for fan_in, fan_out in dims:
        kw, kb, key = jax.random.split(key, 3)
        bound = 1.0 / jnp.sqrt(fan_in)
        w = jax.random.uniform(kw, (fan_in, fan_out), jnp.float32, -bound, bound)
        b = jax.random.uniform(kb, (fan_out,), jnp.float32, -bound, bound)
        params.append((w, b))
    return params


def ann_reference(x, params):
    """Plain-JAX f32 reference for correctness checking."""
    h = x
    for i, (w, b) in enumerate(params):
        h = h @ w + b
        if i < len(params) - 1:
            h = jnp.maximum(h, 0.0)
    return h


if __name__ == "__main__":
    key = jax.random.PRNGKey(0)
    kx, kp = jax.random.split(key)

    batch = 8
    in_features = 32     # stands in for X_train.shape[1]
    num_classes = 4      # stands in for y_train.unique().shape[0]

    x = jax.random.normal(kx, (batch, in_features), jnp.float32)
    params = init_params(kp, in_features, num_classes)

    fwd = jax.jit(ann_forward)
    out = jax.block_until_ready(fwd(x, params))

    ref = ann_reference(x, params)
    assert out.shape == (batch, num_classes)
    # bf16 matmul operands + f32 accumulation: allow a small tolerance vs f32 ref.
    assert jnp.allclose(out, ref, atol=2e-2, rtol=2e-2), (
        float(jnp.max(jnp.abs(out - ref))))

    print("KERNEL_OK")
</pallas_src>

<mosaic_0001>
module attributes {stable_mosaic.version = 11 : i64} {
  func.func @ann_kernel(%arg0: i32, %arg1: memref<8x128xf32, #tpu.memory_space<vmem>>, %arg2: memref<128x256xbf16, #tpu.memory_space<vmem>>, %arg3: memref<1x256xf32, #tpu.memory_space<vmem>>, %arg4: memref<256x128xbf16, #tpu.memory_space<vmem>>, %arg5: memref<1x128xf32, #tpu.memory_space<vmem>>, %arg6: memref<128x128xbf16, #tpu.memory_space<vmem>>, %arg7: memref<1x128xf32, #tpu.memory_space<vmem>>, %arg8: memref<128x128xbf16, #tpu.memory_space<vmem>>, %arg9: memref<1x128xf32, #tpu.memory_space<vmem>>, %arg10: memref<8x128xf32, #tpu.memory_space<vmem>>) attributes {dimension_semantics = [#tpu.dimension_semantics<parallel>], iteration_bounds = array<i64: 1>, scalar_prefetch = 0 : i64, scratch_operands = 0 : i64, tpu.core_type = #tpu.core_type<tc>, window_params = [{transform_indices = @transform_0, window_bounds = array<i64: 8, 128>}, {pipeline_mode = #tpu.pipeline_mode<synchronous>, transform_indices = @transform_1, window_bounds = array<i64: 128, 256>}, {pipeline_mode = #tpu.pipeline_mode<synchronous>, transform_indices = @transform_2, window_bounds = array<i64: 1, 256>}, {pipeline_mode = #tpu.pipeline_mode<synchronous>, transform_indices = @transform_3, window_bounds = array<i64: 256, 128>}, {pipeline_mode = #tpu.pipeline_mode<synchronous>, transform_indices = @transform_4, window_bounds = array<i64: 1, 128>}, {pipeline_mode = #tpu.pipeline_mode<synchronous>, transform_indices = @transform_5, window_bounds = array<i64: 128, 128>}, {pipeline_mode = #tpu.pipeline_mode<synchronous>, transform_indices = @transform_6, window_bounds = array<i64: 1, 128>}, {pipeline_mode = #tpu.pipeline_mode<synchronous>, transform_indices = @transform_7, window_bounds = array<i64: 128, 128>}, {pipeline_mode = #tpu.pipeline_mode<synchronous>, transform_indices = @transform_8, window_bounds = array<i64: 1, 128>}, {transform_indices = @transform_9, window_bounds = array<i64: 8, 128>}]} {
    %c0 = arith.constant 0 : index
    %c0_0 = arith.constant 0 : index
    %0 = vector.load %arg1[%c0, %c0_0] : memref<8x128xf32, #tpu.memory_space<vmem>>, vector<8x128xf32>
    %1 = arith.truncf %0 : vector<8x128xf32> to vector<8x128xbf16>
    %c0_1 = arith.constant 0 : index
    %c0_2 = arith.constant 0 : index
    %2 = vector.load %arg2[%c0_1, %c0_2] : memref<128x256xbf16, #tpu.memory_space<vmem>>, vector<128x256xbf16>
    %cst = arith.constant dense<0.000000e+00> : vector<8x256xf32>
    %3 = tpu.matmul %1, %2, %cst {dimension_numbers = #tpu.dot_dimension_numbers<[1], [0], [0], [1], [0, 0, 1, 1], [], []>} : vector<8x128xbf16>, vector<128x256xbf16>, vector<8x256xf32> -> vector<8x256xf32>
    %c0_3 = arith.constant 0 : index
    %c0_4 = arith.constant 0 : index
    %4 = vector.load %arg3[%c0_3, %c0_4] : memref<1x256xf32, #tpu.memory_space<vmem>>, vector<1x256xf32>
    %5 = vector.broadcast %4 : vector<1x256xf32> to vector<8x256xf32>
    %6 = arith.addf %3, %5 : vector<8x256xf32>
    %cst_5 = arith.constant 0.000000e+00 : f32
    %7 = vector.broadcast %cst_5 : f32 to vector<8x256xf32>
    %8 = arith.maximumf %6, %7 : vector<8x256xf32>
    %9 = arith.truncf %8 : vector<8x256xf32> to vector<8x256xbf16>
    %c0_6 = arith.constant 0 : index
    %c0_7 = arith.constant 0 : index
    %10 = vector.load %arg4[%c0_6, %c0_7] : memref<256x128xbf16, #tpu.memory_space<vmem>>, vector<256x128xbf16>
    %cst_8 = arith.constant dense<0.000000e+00> : vector<8x128xf32>
    %11 = tpu.matmul %9, %10, %cst_8 {dimension_numbers = #tpu.dot_dimension_numbers<[1], [0], [0], [1], [0, 0, 1, 1], [], []>} : vector<8x256xbf16>, vector<256x128xbf16>, vector<8x128xf32> -> vector<8x128xf32>
    %c0_9 = arith.constant 0 : index
    %c0_10 = arith.constant 0 : index
    %12 = vector.load %arg5[%c0_9, %c0_10] : memref<1x128xf32, #tpu.memory_space<vmem>>, vector<1x128xf32>
    %13 = vector.broadcast %12 : vector<1x128xf32> to vector<8x128xf32>
    %14 = arith.addf %11, %13 : vector<8x128xf32>
    %cst_11 = arith.constant 0.000000e+00 : f32
    %15 = vector.broadcast %cst_11 : f32 to vector<8x128xf32>
    %16 = arith.maximumf %14, %15 : vector<8x128xf32>
    %17 = arith.truncf %16 : vector<8x128xf32> to vector<8x128xbf16>
    %c0_12 = arith.constant 0 : index
    %c0_13 = arith.constant 0 : index
    %18 = vector.load %arg6[%c0_12, %c0_13] : memref<128x128xbf16, #tpu.memory_space<vmem>>, vector<128x128xbf16>
    %cst_14 = arith.constant dense<0.000000e+00> : vector<8x128xf32>
    %19 = tpu.matmul %17, %18, %cst_14 {dimension_numbers = #tpu.dot_dimension_numbers<[1], [0], [0], [1], [0, 0, 1, 1], [], []>} : vector<8x128xbf16>, vector<128x128xbf16>, vector<8x128xf32> -> vector<8x128xf32>
    %c0_15 = arith.constant 0 : index
    %c0_16 = arith.constant 0 : index
    %20 = vector.load %arg7[%c0_15, %c0_16] : memref<1x128xf32, #tpu.memory_space<vmem>>, vector<1x128xf32>
    %21 = vector.broadcast %20 : vector<1x128xf32> to vector<8x128xf32>
    %22 = arith.addf %19, %21 : vector<8x128xf32>
    %cst_17 = arith.constant 0.000000e+00 : f32
    %23 = vector.broadcast %cst_17 : f32 to vector<8x128xf32>
    %24 = arith.maximumf %22, %23 : vector<8x128xf32>
    %25 = arith.truncf %24 : vector<8x128xf32> to vector<8x128xbf16>
    %c0_18 = arith.constant 0 : index
    %c0_19 = arith.constant 0 : index
    %26 = vector.load %arg8[%c0_18, %c0_19] : memref<128x128xbf16, #tpu.memory_space<vmem>>, vector<128x128xbf16>
    %cst_20 = arith.constant dense<0.000000e+00> : vector<8x128xf32>
    %27 = tpu.matmul %25, %26, %cst_20 {dimension_numbers = #tpu.dot_dimension_numbers<[1], [0], [0], [1], [0, 0, 1, 1], [], []>} : vector<8x128xbf16>, vector<128x128xbf16>, vector<8x128xf32> -> vector<8x128xf32>
    %c0_21 = arith.constant 0 : index
    %c0_22 = arith.constant 0 : index
    %28 = vector.load %arg9[%c0_21, %c0_22] : memref<1x128xf32, #tpu.memory_space<vmem>>, vector<1x128xf32>
    %29 = vector.broadcast %28 : vector<1x128xf32> to vector<8x128xf32>
    %30 = arith.addf %27, %29 : vector<8x128xf32>
    %c0_23 = arith.constant 0 : index
    %c0_24 = arith.constant 0 : index
    %31 = vector.load %arg10[%c0_23, %c0_24] : memref<8x128xf32, #tpu.memory_space<vmem>>, vector<8x128xf32>
    tpu.vector_store %arg10[%c0_23, %c0_24], %30 {strides = array<i32>} : memref<8x128xf32, #tpu.memory_space<vmem>>, vector<8x128xf32>,
    return
  }
  func.func @transform_0(%arg0: i32) -> (i32, i32) {
    %c0_i32 = arith.constant 0 : i32
    %c0_i32_0 = arith.constant 0 : i32
    return %arg0, %c0_i32 : i32, i32
  }
  func.func @transform_1(%arg0: i32) -> (i32, i32) {
    %c0_i32 = arith.constant 0 : i32
    %c0_i32_0 = arith.constant 0 : i32
    %c0_i32_1 = arith.constant 0 : i32
    return %c0_i32, %c0_i32_0 : i32, i32
  }
  func.func @transform_2(%arg0: i32) -> (i32, i32) {
    %c0_i32 = arith.constant 0 : i32
    %c0_i32_0 = arith.constant 0 : i32
    %c0_i32_1 = arith.constant 0 : i32
    return %c0_i32, %c0_i32_0 : i32, i32
  }
  func.func @transform_3(%arg0: i32) -> (i32, i32) {
    %c0_i32 = arith.constant 0 : i32
    %c0_i32_0 = arith.constant 0 : i32
    %c0_i32_1 = arith.constant 0 : i32
    return %c0_i32, %c0_i32_0 : i32, i32
  }
  func.func @transform_4(%arg0: i32) -> (i32, i32) {
    %c0_i32 = arith.constant 0 : i32
    %c0_i32_0 = arith.constant 0 : i32
    %c0_i32_1 = arith.constant 0 : i32
    return %c0_i32, %c0_i32_0 : i32, i32
  }
  func.func @transform_5(%arg0: i32) -> (i32, i32) {
    %c0_i32 = arith.constant 0 : i32
    %c0_i32_0 = arith.constant 0 : i32
    %c0_i32_1 = arith.constant 0 : i32
    return %c0_i32, %c0_i32_0 : i32, i32
  }
  func.func @transform_6(%arg0: i32) -> (i32, i32) {
    %c0_i32 = arith.constant 0 : i32
    %c0_i32_0 = arith.constant 0 : i32
    %c0_i32_1 = arith.constant 0 : i32
    return %c0_i32, %c0_i32_0 : i32, i32
  }
  func.func @transform_7(%arg0: i32) -> (i32, i32) {
    %c0_i32 = arith.constant 0 : i32
    %c0_i32_0 = arith.constant 0 : i32
    %c0_i32_1 = arith.constant 0 : i32
    return %c0_i32, %c0_i32_0 : i32, i32
  }
  func.func @transform_8(%arg0: i32) -> (i32, i32) {
    %c0_i32 = arith.constant 0 : i32
    %c0_i32_0 = arith.constant 0 : i32
    %c0_i32_1 = arith.constant 0 : i32
    return %c0_i32, %c0_i32_0 : i32, i32
  }
  func.func @transform_9(%arg0: i32) -> (i32, i32) {
    %c0_i32 = arith.constant 0 : i32
    %c0_i32_0 = arith.constant 0 : i32
    return %arg0, %c0_i32 : i32, i32
  }
}

</mosaic_0001>

<llo_original>
// kernel: ann_forward.1
$region0: #{ann_forward.1}
  #allocation0 [shape = 'u32[]', space=smem, size = 0x4, offset = 0x4, fixed_abs, tag = 'smem constant byte address 0x4 - core index']
  #allocation1 [shape = 'u32[144,128]{1,0:T(1,128)}', space=vmem, size = 0x12000, scoped, tag = 'internal scratch']
  %s0 = inlined_call_operand.vmem [shape: f32[8,128], index: 0, kind: input, shape index: {}]
  %s1 = inlined_call_operand.vmem [shape: bf16[128,256], index: 1, kind: input, shape index: {}]
  %s2 = inlined_call_operand.vmem [shape: f32[1,256], index: 2, kind: input, shape index: {}]
  %s3 = inlined_call_operand.vmem [shape: bf16[256,128], index: 3, kind: input, shape index: {}]
  %s4 = inlined_call_operand.vmem [shape: f32[1,128], index: 4, kind: input, shape index: {}]
  %s5 = inlined_call_operand.vmem [shape: bf16[128,128], index: 5, kind: input, shape index: {}]
  %s6 = inlined_call_operand.vmem [shape: f32[1,128], index: 6, kind: input, shape index: {}]
  %s7 = inlined_call_operand.vmem [shape: bf16[128,128], index: 7, kind: input, shape index: {}]
  %s8 = inlined_call_operand.vmem [shape: f32[1,128], index: 8, kind: input, shape index: {}]
  %s9 = inlined_call_operand.vmem [shape: f32[8,128], index: 9, kind: output, shape index: {}]
  %s10 = sld [smem:[#allocation0]]
  $region46: #{ann_forward.1} parent=0
    _
  %s12 = ssub.s32 1, %s10
  %s13 = scalar_select 0, %s12, %s10
  // Predicated region
  $region2: #{ann_forward.1} parent=0 // pred_check
    _
  $region3: #{ann_forward.1} parent=0 // pred_check_branch
    %15 = sbr.rel (0) target = $region5
  $region4: #{ann_forward.1} parent=0 // pred_region
    _
  $region5: #{ann_forward.1} parent=0 // pred_fallthru
    _
  // Predicated region
  $region6: #{ann_forward.1} parent=0 // pred_check
    _
  $region7: #{ann_forward.1} parent=0 // pred_check_branch
    %17 = sbr.rel (0) target = $region9
  $region8: #{ann_forward.1} parent=0 // pred_region
    _
  $region9: #{ann_forward.1} parent=0 // pred_fallthru
    _
  // Predicated region
  $region10: #{ann_forward.1} parent=0 // pred_check
    _
  $region11: #{ann_forward.1} parent=0 // pred_check_branch
    %19 = sbr.rel (0) target = $region13
  $region12: #{ann_forward.1} parent=0 // pred_region
    _
  $region13: #{ann_forward.1} parent=0 // pred_fallthru
    _
  // Predicated region
  $region14: #{ann_forward.1} parent=0 // pred_check
    _
  $region15: #{ann_forward.1} parent=0 // pred_check_branch
    %21 = sbr.rel (0) target = $region17
  $region16: #{ann_forward.1} parent=0 // pred_region
    _
  $region17: #{ann_forward.1} parent=0 // pred_fallthru
    _
  // Predicated region
  $region18: #{ann_forward.1} parent=0 // pred_check
    _
  $region19: #{ann_forward.1} parent=0 // pred_check_branch
    %23 = sbr.rel (0) target = $region21
  $region20: #{ann_forward.1} parent=0 // pred_region
    _
  $region21: #{ann_forward.1} parent=0 // pred_fallthru
    _
  // Predicated region
  $region22: #{ann_forward.1} parent=0 // pred_check
    _
  $region23: #{ann_forward.1} parent=0 // pred_check_branch
    %25 = sbr.rel (0) target = $region25
  $region24: #{ann_forward.1} parent=0 // pred_region
    _
  $region25: #{ann_forward.1} parent=0 // pred_fallthru
    _
  // Predicated region
  $region26: #{ann_forward.1} parent=0 // pred_check
    _
  $region27: #{ann_forward.1} parent=0 // pred_check_branch
    %27 = sbr.rel (0) target = $region29
  $region28: #{ann_forward.1} parent=0 // pred_region
    _
  $region29: #{ann_forward.1} parent=0 // pred_fallthru
    _
  // Predicated region
  $region30: #{ann_forward.1} parent=0 // pred_check
    _
  $region31: #{ann_forward.1} parent=0 // pred_check_branch
    %29 = sbr.rel (0) target = $region33
  $region32: #{ann_forward.1} parent=0 // pred_region
    _
  $region33: #{ann_forward.1} parent=0 // pred_fallthru
    _
  // Predicated region
  $region34: #{ann_forward.1} parent=0 // pred_check
    _
  $region35: #{ann_forward.1} parent=0 // pred_check_branch
    %31 = sbr.rel (0) target = $region37
  $region36: #{ann_forward.1} parent=0 // pred_region
    _
  $region37: #{ann_forward.1} parent=0 // pred_fallthru
    _
  %v33 = vld [vmem:[%s0] sm:$0xff]
  %v34 = vpack.c.bf16 %v33, %v33
  %v35 = vld [vmem:[%s1] sm:$0xff]
  %v36 = vld [vmem:[%s1 + $0x8] sm:$0xff]
  %v37 = vld [vmem:[%s1 + $0x10] sm:$0xff]
  %v38 = vld [vmem:[%s1 + $0x18] sm:$0xff]
  %v39 = vld [vmem:[%s1 + $0x20] sm:$0xff]
  %v40 = vld [vmem:[%s1 + $0x28] sm:$0xff]
  %v41 = vld [vmem:[%s1 + $0x30] sm:$0xff]
  %v42 = vld [vmem:[%s1 + $0x38] sm:$0xff]
  %v43 = vld [vmem:[%s1 + $0x40] sm:$0xff]
  %v44 = vld [vmem:[%s1 + $0x48] sm:$0xff]
  %v45 = vld [vmem:[%s1 + $0x50] sm:$0xff]
  %v46 = vld [vmem:[%s1 + $0x58] sm:$0xff]
  %v47 = vld [vmem:[%s1 + $0x60] sm:$0xff]
  %v48 = vld [vmem:[%s1 + $0x68] sm:$0xff]
  %v49 = vld [vmem:[%s1 + $0x70] sm:$0xff]
  %v50 = vld [vmem:[%s1 + $0x78] sm:$0xff]
  %v51 = vld [vmem:[%s2] sm:$0x3]
  %v53 = vlaneseq
  %v54 = vshrl.u32 %v53, 7
  %v55 = vsub.s32 0, %v54
  %v56 = vrot.slane %v51, %v55
  %v57 = vlaneseq
  %v58 = vshrl.u32 %v57, 7
  %v59 = vsub.s32 1, %v58
  %v60 = vrot.slane %v51, %v59
  %v79 = vunpack.c.l.b16 %v35
  %v80 = vunpack.c.h.b16 %v35
  %v81 = vunpack.c.l.b16 %v36
  %v82 = vunpack.c.h.b16 %v36
  %v83 = vunpack.c.l.b16 %v37
  %v84 = vunpack.c.h.b16 %v37
  %v85 = vunpack.c.l.b16 %v38
  %v86 = vunpack.c.h.b16 %v38
  %v87 = vunpack.c.l.b16 %v39
  %v88 = vunpack.c.h.b16 %v39
  %v89 = vunpack.c.l.b16 %v40
  %v90 = vunpack.c.h.b16 %v40
  %v91 = vunpack.c.l.b16 %v41
  %v92 = vunpack.c.h.b16 %v41
  %v93 = vunpack.c.l.b16 %v42
  %v94 = vunpack.c.h.b16 %v42
  %v95 = vunpack.c.l.b16 %v43
  %v96 = vunpack.c.h.b16 %v43
  %v97 = vunpack.c.l.b16 %v44
  %v98 = vunpack.c.h.b16 %v44
  %v99 = vunpack.c.l.b16 %v45
  %v100 = vunpack.c.h.b16 %v45
  %v101 = vunpack.c.l.b16 %v46
  %v102 = vunpack.c.h.b16 %v46
  %v103 = vunpack.c.l.b16 %v47
  %v104 = vunpack.c.h.b16 %v47
  %v105 = vunpack.c.l.b16 %v48
  %v106 = vunpack.c.h.b16 %v48
  %v107 = vunpack.c.l.b16 %v49
  %v108 = vunpack.c.h.b16 %v49
  %v109 = vunpack.c.l.b16 %v50
  %v110 = vunpack.c.h.b16 %v50
  %v111 = vpack.c.b16 %v81, %v79
  %v112 = vpack.c.b16 %v82, %v80
  %v113 = vpack.c.b16 %v85, %v83
  %v114 = vpack.c.b16 %v86, %v84
  %v115 = vpack.c.b16 %v89, %v87
  %v116 = vpack.c.b16 %v90, %v88
  %v117 = vpack.c.b16 %v93, %v91
  %v118 = vpack.c.b16 %v94, %v92
  %v119 = vpack.c.b16 %v97, %v95
  %v120 = vpack.c.b16 %v98, %v96
  %v121 = vpack.c.b16 %v101, %v99
  %v122 = vpack.c.b16 %v102, %v100
  %v123 = vpack.c.b16 %v105, %v103
  %v124 = vpack.c.b16 %v106, %v104
  %v125 = vpack.c.b16 %v109, %v107
  %v126 = vpack.c.b16 %v110, %v108
  %143 = vmatprep.subr.bf16.mxu0 %v126
  %144 = vmatpush1.bf16.msra.mxu0 %v125
  %145 = vmatprep.subr.bf16.mxu0 %v124
  %146 = vmatpush1.bf16.msra.mxu0 %v123
  %147 = vmatprep.subr.bf16.mxu0 %v122
  %148 = vmatpush1.bf16.msra.mxu0 %v121
  %149 = vmatprep.subr.bf16.mxu0 %v120
  %150 = vmatpush1.bf16.msra.mxu0 %v119
  %151 = vmatprep.subr.bf16.mxu0 %v118
  %152 = vmatpush1.bf16.msra.mxu0 %v117
  %153 = vmatprep.subr.bf16.mxu0 %v116
  %154 = vmatpush1.bf16.msra.mxu0 %v115
  %155 = vmatprep.subr.bf16.mxu0 %v114
  %156 = vmatpush1.bf16.msra.mxu0 %v113
  %157 = vmatprep.subr.bf16.mxu0 %v112
  %158 = vmatpush1.bf16.msra.mxu0 %v111
  %159 = vmatprep.subr.bf16.mxu0 0
  %160 = vmatpush2.bf16.msra.mxu0 0
  %161 = vmatprep.subr.bf16.mxu0 0
  %162 = vmatpush2.bf16.msra.mxu0 0
  %163 = vmatprep.subr.bf16.mxu0 0
  %164 = vmatpush2.bf16.msra.mxu0 0
  %165 = vmatprep.subr.bf16.mxu0 0
  %166 = vmatpush2.bf16.msra.mxu0 0
  %167 = vmatprep.subr.bf16.mxu0 0
  %168 = vmatpush2.bf16.msra.mxu0 0
  %169 = vmatprep.subr.bf16.mxu0 0
  %170 = vmatpush2.bf16.msra.mxu0 0
  %171 = vmatprep.subr.bf16.mxu0 0
  %172 = vmatpush2.bf16.msra.mxu0 0
  %173 = vmatprep.subr.bf16.mxu0 0
  %174 = vmatpush2.bf16.msra.mxu0 0
  %175 = vmatprep.mubr.bf16.mxu0 0
  %176 = vmatmul.mubr.bf16.gmra.mxu0 %v34
  %v177 = vpop.f32.mrf.mxu0
  %v178 = vadd.f32 %v56, %v177
  %v179 = vpop.f32.mrf.mxu0
  %v180 = vadd.f32 %v60, %v179
  %v181 = vpop.f32.mrf.mxu0
  %v182 = vpop.f32.mrf.mxu0
  %183 = vdwg.mxu0
  %v184 = vmax.f32 %v178, 0.0
  %v185 = vmax.f32 %v180, 0.0
  %v186 = vpack.c.bf16 %v184, %v184
  %v187 = vpack.c.bf16 %v185, %v185
  %v188 = vld [vmem:[%s3] sm:$0xf]
  %v189 = vld [vmem:[%s3 + $0x4] sm:$0xf]
  %v190 = vld [vmem:[%s3 + $0x8] sm:$0xf]
  %v191 = vld [vmem:[%s3 + $0xc] sm:$0xf]
  %v192 = vld [vmem:[%s3 + $0x10] sm:$0xf]
  %v193 = vld [vmem:[%s3 + $0x14] sm:$0xf]
  %v194 = vld [vmem:[%s3 + $0x18] sm:$0xf]
  %v195 = vld [vmem:[%s3 + $0x1c] sm:$0xf]
  %v196 = vld [vmem:[%s3 + $0x20] sm:$0xf]
  %v197 = vld [vmem:[%s3 + $0x24] sm:$0xf]
  %v198 = vld [vmem:[%s3 + $0x28] sm:$0xf]
  %v199 = vld [vmem:[%s3 + $0x2c] sm:$0xf]
  %v200 = vld [vmem:[%s3 + $0x30] sm:$0xf]
  %v201 = vld [vmem:[%s3 + $0x34] sm:$0xf]
  %v202 = vld [vmem:[%s3 + $0x38] sm:$0xf]
  %v203 = vld [vmem:[%s3 + $0x3c] sm:$0xf]
  %v204 = vld [vmem:[%s3 + $0x40] sm:$0xf]
  %v205 = vld [vmem:[%s3 + $0x44] sm:$0xf]
  %v206 = vld [vmem:[%s3 + $0x48] sm:$0xf]
  %v207 = vld [vmem:[%s3 + $0x4c] sm:$0xf]
  %v208 = vld [vmem:[%s3 + $0x50] sm:$0xf]
  %v209 = vld [vmem:[%s3 + $0x54] sm:$0xf]
  %v210 = vld [vmem:[%s3 + $0x58] sm:$0xf]
  %v211 = vld [vmem:[%s3 + $0x5c] sm:$0xf]
  %v212 = vld [vmem:[%s3 + $0x60] sm:$0xf]
  %v213 = vld [vmem:[%s3 + $0x64] sm:$0xf]
  %v214 = vld [vmem:[%s3 + $0x68] sm:$0xf]
  %v215 = vld [vmem:[%s3 + $0x6c] sm:$0xf]
  %v216 = vld [vmem:[%s3 + $0x70] sm:$0xf]
  %v217 = vld [vmem:[%s3 + $0x74] sm:$0xf]
  %v218 = vld [vmem:[%s3 + $0x78] sm:$0xf]
  %v219 = vld [vmem:[%s3 + $0x7c] sm:$0xf]
  %v220 = vld [vmem:[%s4] sm:$0x1]
  %v222 = vlaneseq
  %v223 = vshrl.u32 %v222, 7
  %v224 = vsub.s32 0, %v223
  %v225 = vrot.slane %v220, %v224
  %v259 = vunpack.c.l.b16 %v188
  %v260 = vunpack.c.l.b16 %v189
  %v261 = vunpack.c.l.b16 %v190
  %v262 = vunpack.c.l.b16 %v191
  %v263 = vunpack.c.l.b16 %v192
  %v264 = vunpack.c.l.b16 %v193
  %v265 = vunpack.c.l.b16 %v194
  %v266 = vunpack.c.l.b16 %v195
  %v267 = vunpack.c.l.b16 %v196
  %v268 = vunpack.c.l.b16 %v197
  %v269 = vunpack.c.l.b16 %v198
  %v270 = vunpack.c.l.b16 %v199
  %v271 = vunpack.c.l.b16 %v200
  %v272 = vunpack.c.l.b16 %v201
  %v273 = vunpack.c.l.b16 %v202
  %v274 = vunpack.c.l.b16 %v203
  %v275 = vunpack.c.l.b16 %v204
  %v276 = vunpack.c.l.b16 %v205
  %v277 = vunpack.c.l.b16 %v206
  %v278 = vunpack.c.l.b16 %v207
  %v279 = vunpack.c.l.b16 %v208
  %v280 = vunpack.c.l.b16 %v209
  %v281 = vunpack.c.l.b16 %v210
  %v282 = vunpack.c.l.b16 %v211
  %v283 = vunpack.c.l.b16 %v212
  %v284 = vunpack.c.l.b16 %v213
  %v285 = vunpack.c.l.b16 %v214
  %v286 = vunpack.c.l.b16 %v215
  %v287 = vunpack.c.l.b16 %v216
  %v288 = vunpack.c.l.b16 %v217
  %v289 = vunpack.c.l.b16 %v218
  %v290 = vunpack.c.l.b16 %v219
  %v291 = vpack.c.b16 %v260, %v259
  %v292 = vpack.c.b16 %v262, %v261
  %v293 = vpack.c.b16 %v264, %v263
  %v294 = vpack.c.b16 %v266, %v265
  %v295 = vpack.c.b16 %v268, %v267
  %v296 = vpack.c.b16 %v270, %v269
  %v297 = vpack.c.b16 %v272, %v271
  %v298 = vpack.c.b16 %v274, %v273
  %v299 = vpack.c.b16 %v276, %v275
  %v300 = vpack.c.b16 %v278, %v277
  %v301 = vpack.c.b16 %v280, %v279
  %v302 = vpack.c.b16 %v282, %v281
  %v303 = vpack.c.b16 %v284, %v283
  %v304 = vpack.c.b16 %v286, %v285
  %v305 = vpack.c.b16 %v288, %v287
  %v306 = vpack.c.b16 %v290, %v289
  %323 = vmatprep.subr.bf16.mxu0 0
  %324 = vmatpush1.bf16.msra.mxu0 %v298
  %325 = vmatprep.subr.bf16.mxu0 0
  %326 = vmatpush1.bf16.msra.mxu0 %v297
  %327 = vmatprep.subr.bf16.mxu0 0
  %328 = vmatpush1.bf16.msra.mxu0 %v296
  %329 = vmatprep.subr.bf16.mxu0 0
  %330 = vmatpush1.bf16.msra.mxu0 %v295
  %331 = vmatprep.subr.bf16.mxu0 0
  %332 = vmatpush1.bf16.msra.mxu0 %v294
  %333 = vmatprep.subr.bf16.mxu0 0
  %334 = vmatpush1.bf16.msra.mxu0 %v293
  %335 = vmatprep.subr.bf16.mxu0 0
  %336 = vmatpush1.bf16.msra.mxu0 %v292
  %337 = vmatprep.subr.bf16.mxu0 0
  %338 = vmatpush1.bf16.msra.mxu0 %v291
  %339 = vmatprep.subr.bf16.mxu0 0
  %340 = vmatpush2.bf16.msra.mxu0 %v306
  %341 = vmatprep.subr.bf16.mxu0 0
  %342 = vmatpush2.bf16.msra.mxu0 %v305
  %343 = vmatprep.subr.bf16.mxu0 0
  %344 = vmatpush2.bf16.msra.mxu0 %v304
  %345 = vmatprep.subr.bf16.mxu0 0
  %346 = vmatpush2.bf16.msra.mxu0 %v303
  %347 = vmatprep.subr.bf16.mxu0 0
  %348 = vmatpush2.bf16.msra.mxu0 %v302
  %349 = vmatprep.subr.bf16.mxu0 0
  %350 = vmatpush2.bf16.msra.mxu0 %v301
  %351 = vmatprep.subr.bf16.mxu0 0
  %352 = vmatpush2.bf16.msra.mxu0 %v300
  %353 = vmatprep.subr.bf16.mxu0 0
  %354 = vmatpush2.bf16.msra.mxu0 %v299
  %355 = vmatprep.mubr.bf16.mxu0 %v187
  %356 = vmatmul.mubr.bf16.gmra.mxu0 %v186
  %v357 = vpop.f32.mrf.mxu0
  %v358 = vadd.f32 %v225, %v357
  %v359 = vpop.f32.mrf.mxu0
  %v360 = vpop.f32.mrf.mxu0
  %v361 = vpop.f32.mrf.mxu0
  %362 = vdwg.mxu0
  %v363 = vmax.f32 %v358, 0.0
  %v364 = vpack.c.bf16 %v363, %v363
  %v365 = vld [vmem:[%s5] sm:$0xf]
  %v366 = vld [vmem:[%s5 + $0x4] sm:$0xf]
  %v367 = vld [vmem:[%s5 + $0x8] sm:$0xf]
  %v368 = vld [vmem:[%s5 + $0xc] sm:$0xf]
  %v369 = vld [vmem:[%s5 + $0x10] sm:$0xf]
  %v370 = vld [vmem:[%s5 + $0x14] sm:$0xf]
  %v371 = vld [vmem:[%s5 + $0x18] sm:$0xf]
  %v372 = vld [vmem:[%s5 + $0x1c] sm:$0xf]
  %v373 = vld [vmem:[%s5 + $0x20] sm:$0xf]
  %v374 = vld [vmem:[%s5 + $0x24] sm:$0xf]
  %v375 = vld [vmem:[%s5 + $0x28] sm:$0xf]
  %v376 = vld [vmem:[%s5 + $0x2c] sm:$0xf]
  %v377 = vld [vmem:[%s5 + $0x30] sm:$0xf]
  %v378 = vld [vmem:[%s5 + $0x34] sm:$0xf]
  %v379 = vld [vmem:[%s5 + $0x38] sm:$0xf]
  %v380 = vld [vmem:[%s5 + $0x3c] sm:$0xf]
  %v381 = vld [vmem:[%s6] sm:$0x1]
  %v383 = vlaneseq
  %v384 = vshrl.u32 %v383, 7
  %v385 = vsub.s32 0, %v384
  %v386 = vrot.slane %v381, %v385
  %v404 = vunpack.c.l.b16 %v365
  %v405 = vunpack.c.l.b16 %v366
  %v406 = vunpack.c.l.b16 %v367
  %v407 = vunpack.c.l.b16 %v368
  %v408 = vunpack.c.l.b16 %v369
  %v409 = vunpack.c.l.b16 %v370
  %v410 = vunpack.c.l.b16 %v371
  %v411 = vunpack.c.l.b16 %v372
  %v412 = vunpack.c.l.b16 %v373
  %v413 = vunpack.c.l.b16 %v374
  %v414 = vunpack.c.l.b16 %v375
  %v415 = vunpack.c.l.b16 %v376
  %v416 = vunpack.c.l.b16 %v377
  %v417 = vunpack.c.l.b16 %v378
  %v418 = vunpack.c.l.b16 %v379
  %v419 = vunpack.c.l.b16 %v380
  %v420 = vpack.c.b16 %v405, %v404
  %v421 = vpack.c.b16 %v407, %v406
  %v422 = vpack.c.b16 %v409, %v408
  %v423 = vpack.c.b16 %v411, %v410
  %v424 = vpack.c.b16 %v413, %v412
  %v425 = vpack.c.b16 %v415, %v414
  %v426 = vpack.c.b16 %v417, %v416
  %v427 = vpack.c.b16 %v419, %v418
  %436 = vmatprep.subr.bf16.mxu0 0
  %437 = vmatpush1.bf16.msra.mxu0 %v427
  %438 = vmatprep.subr.bf16.mxu0 0
  %439 = vmatpush1.bf16.msra.mxu0 %v426
  %440 = vmatprep.subr.bf16.mxu0 0
  %441 = vmatpush1.bf16.msra.mxu0 %v425
  %442 = vmatprep.subr.bf16.mxu0 0
  %443 = vmatpush1.bf16.msra.mxu0 %v424
  %444 = vmatprep.subr.bf16.mxu0 0
  %445 = vmatpush1.bf16.msra.mxu0 %v423
  %446 = vmatprep.subr.bf16.mxu0 0
  %447 = vmatpush1.bf16.msra.mxu0 %v422
  %448 = vmatprep.subr.bf16.mxu0 0
  %449 = vmatpush1.bf16.msra.mxu0 %v421
  %450 = vmatprep.subr.bf16.mxu0 0
  %451 = vmatpush1.bf16.msra.mxu0 %v420
  %452 = vmatprep.subr.bf16.mxu0 0
  %453 = vmatpush2.bf16.msra.mxu0 0
  %454 = vmatprep.subr.bf16.mxu0 0
  %455 = vmatpush2.bf16.msra.mxu0 0
  %456 = vmatprep.subr.bf16.mxu0 0
  %457 = vmatpush2.bf16.msra.mxu0 0
  %458 = vmatprep.subr.bf16.mxu0 0
  %459 = vmatpush2.bf16.msra.mxu0 0
  %460 = vmatprep.subr.bf16.mxu0 0
  %461 = vmatpush2.bf16.msra.mxu0 0
  %462 = vmatprep.subr.bf16.mxu0 0
  %463 = vmatpush2.bf16.msra.mxu0 0
  %464 = vmatprep.subr.bf16.mxu0 0
  %465 = vmatpush2.bf16.msra.mxu0 0
  %466 = vmatprep.subr.bf16.mxu0 0
  %467 = vmatpush2.bf16.msra.mxu0 0
  %468 = vmatprep.mubr.bf16.mxu0 0
  %469 = vmatmul.mubr.bf16.gmra.mxu0 %v364
  %v470 = vpop.f32.mrf.mxu0
  %v471 = vadd.f32 %v386, %v470
  %v472 = vpop.f32.mrf.mxu0
  %v473 = vpop.f32.mrf.mxu0
  %v474 = vpop.f32.mrf.mxu0
  %475 = vdwg.mxu0
  %v476 = vmax.f32 %v471, 0.0
  %v477 = vpack.c.bf16 %v476, %v476
  %v478 = vld [vmem:[%s7] sm:$0xf]
  %v479 = vld [vmem:[%s7 + $0x4] sm:$0xf]
  %v480 = vld [vmem:[%s7 + $0x8] sm:$0xf]
  %v481 = vld [vmem:[%s7 + $0xc] sm:$0xf]
  %v482 = vld [vmem:[%s7 + $0x10] sm:$0xf]
  %v483 = vld [vmem:[%s7 + $0x14] sm:$0xf]
  %v484 = vld [vmem:[%s7 + $0x18] sm:$0xf]
  %v485 = vld [vmem:[%s7 + $0x1c] sm:$0xf]
  %v486 = vld [vmem:[%s7 + $0x20] sm:$0xf]
  %v487 = vld [vmem:[%s7 + $0x24] sm:$0xf]
  %v488 = vld [vmem:[%s7 + $0x28] sm:$0xf]
  %v489 = vld [vmem:[%s7 + $0x2c] sm:$0xf]
  %v490 = vld [vmem:[%s7 + $0x30] sm:$0xf]
  %v491 = vld [vmem:[%s7 + $0x34] sm:$0xf]
  %v492 = vld [vmem:[%s7 + $0x38] sm:$0xf]
  %v493 = vld [vmem:[%s7 + $0x3c] sm:$0xf]
  %v494 = vld [vmem:[%s8] sm:$0x1]
  %v496 = vlaneseq
  %v497 = vshrl.u32 %v496, 7
  %v498 = vsub.s32 0, %v497
  %v499 = vrot.slane %v494, %v498
  %v517 = vunpack.c.l.b16 %v478
  %v518 = vunpack.c.l.b16 %v479
  %v519 = vunpack.c.l.b16 %v480
  %v520 = vunpack.c.l.b16 %v481
  %v521 = vunpack.c.l.b16 %v482
  %v522 = vunpack.c.l.b16 %v483
  %v523 = vunpack.c.l.b16 %v484
  %v524 = vunpack.c.l.b16 %v485
  %v525 = vunpack.c.l.b16 %v486
  %v526 = vunpack.c.l.b16 %v487
  %v527 = vunpack.c.l.b16 %v488
  %v528 = vunpack.c.l.b16 %v489
  %v529 = vunpack.c.l.b16 %v490
  %v530 = vunpack.c.l.b16 %v491
  %v531 = vunpack.c.l.b16 %v492
  %v532 = vunpack.c.l.b16 %v493
  %v533 = vpack.c.b16 %v518, %v517
  %v534 = vpack.c.b16 %v520, %v519
  %v535 = vpack.c.b16 %v522, %v521
  %v536 = vpack.c.b16 %v524, %v523
  %v537 = vpack.c.b16 %v526, %v525
  %v538 = vpack.c.b16 %v528, %v527
  %v539 = vpack.c.b16 %v530, %v529
  %v540 = vpack.c.b16 %v532, %v531
  %549 = vmatprep.subr.bf16.mxu0 0
  %550 = vmatpush1.bf16.msra.mxu0 %v540
  %551 = vmatprep.subr.bf16.mxu0 0
  %552 = vmatpush1.bf16.msra.mxu0 %v539
  %553 = vmatprep.subr.bf16.mxu0 0
  %554 = vmatpush1.bf16.msra.mxu0 %v538
  %555 = vmatprep.subr.bf16.mxu0 0
  %556 = vmatpush1.bf16.msra.mxu0 %v537
  %557 = vmatprep.subr.bf16.mxu0 0
  %558 = vmatpush1.bf16.msra.mxu0 %v536
  %559 = vmatprep.subr.bf16.mxu0 0
  %560 = vmatpush1.bf16.msra.mxu0 %v535
  %561 = vmatprep.subr.bf16.mxu0 0
  %562 = vmatpush1.bf16.msra.mxu0 %v534
  %563 = vmatprep.subr.bf16.mxu0 0
  %564 = vmatpush1.bf16.msra.mxu0 %v533
  %565 = vmatprep.subr.bf16.mxu0 0
  %566 = vmatpush2.bf16.msra.mxu0 0
  %567 = vmatprep.subr.bf16.mxu0 0
  %568 = vmatpush2.bf16.msra.mxu0 0
  %569 = vmatprep.subr.bf16.mxu0 0
  %570 = vmatpush2.bf16.msra.mxu0 0
  %571 = vmatprep.subr.bf16.mxu0 0
  %572 = vmatpush2.bf16.msra.mxu0 0
  %573 = vmatprep.subr.bf16.mxu0 0
  %574 = vmatpush2.bf16.msra.mxu0 0
  %575 = vmatprep.subr.bf16.mxu0 0
  %576 = vmatpush2.bf16.msra.mxu0 0
  %577 = vmatprep.subr.bf16.mxu0 0
  %578 = vmatpush2.bf16.msra.mxu0 0
  %579 = vmatprep.subr.bf16.mxu0 0
  %580 = vmatpush2.bf16.msra.mxu0 0
  %581 = vmatprep.mubr.bf16.mxu0 0
  %582 = vmatmul.mubr.bf16.gmra.mxu0 %v477
  %v583 = vpop.f32.mrf.mxu0
  %v584 = vadd.f32 %v499, %v583
  %v585 = vpop.f32.mrf.mxu0
  %v586 = vpop.f32.mrf.mxu0
  %v587 = vpop.f32.mrf.mxu0
  %588 = vdwg.mxu0
  %589 = vst [vmem:[%s9] sm:$0xff] %v584
  // Predicated region
  $region38: #{ann_forward.1} parent=0 // pred_check
    _
  $region39: #{ann_forward.1} parent=0 // pred_check_branch
    %591 = sbr.rel (0) target = $region41
  $region40: #{ann_forward.1} parent=0 // pred_region
    _
  $region41: #{ann_forward.1} parent=0 // pred_fallthru
    _
  // Predicated region
  $region42: #{ann_forward.1} parent=0 // pred_check
    _
  $region43: #{ann_forward.1} parent=0 // pred_check_branch
    %593 = sbr.rel (0) target = $region45
  $region44: #{ann_forward.1} parent=0 // pred_region
    _
  $region45: #{ann_forward.1} parent=0 // pred_fallthru
    _

</llo_original>
